<compile_context>
chip_gen: v6e
topology: v6e:2x2x1
jax: 0.10.0
libtpu: 0.0.40
codegen_flags: <defaults>
</compile_context>

<pallas_src>
import jax
import jax.numpy as jnp
from jax.experimental import pallas as pl
from jax.experimental.pallas import tpu as pltpu

LANE = 128                 # lane width (fast axis)
SUBLANE = 8                # sublane granularity (slow axis)
MAX_TM = 512               # row-tile cap (amortizes per-step overhead)
MAX_TN = 512               # output-lane tile cap (v7x VMEM / 2-TC parallelism)
VMEM_LIMIT = 64 * 1024 * 1024


def _round_up(x, m):
    return ((x + m - 1) // m) * m


def _pad2d(a, rows, cols):
    r, c = a.shape
    if r == rows and c == cols:
        return a
    return jnp.pad(a, ((0, rows - r), (0, cols - c)))


def _choose_row_tiling(batch):
    """Pick (tm, Bp): minimal row padding, prefer >=2 tiles (v7x dual-TC)."""
    bp0 = _round_up(max(batch, 1), SUBLANE)
    best_key, best_tm, best_bp = None, bp0, bp0
    for tm in range(SUBLANE, min(MAX_TM, bp0) + 1, SUBLANE):
        bp = _round_up(bp0, tm)
        pad = bp - batch
        ntiles = bp // tm
        key = (pad, 0 if ntiles >= 2 else 1, -tm)
        if best_key is None or key < best_key:
            best_key, best_tm, best_bp = key, tm, bp
    return best_tm, best_bp


def _choose_tn(n_p, max_tn=MAX_TN):
    if n_p <= max_tn:
        return n_p
    for tn in range(max_tn, 0, -LANE):
        if n_p % tn == 0:
            return tn
    return n_p


# ---------------------------------------------------------------------------
# Kernels
# ---------------------------------------------------------------------------
def _dual_linear_relu_kernel(x1_ref, x2_ref, w_ref, b_ref, y1_ref, y2_ref):
    # Both towers share one weight tile: y_t = relu(x_t @ W + b), t in {1,2}.
    w = w_ref[...]                               # bf16 weight tile (K, TN)
    b = b_ref[...]                               # f32 bias       (1, TN)
    x1 = x1_ref[...].astype(jnp.bfloat16)
    x2 = x2_ref[...].astype(jnp.bfloat16)
    y1 = jnp.dot(x1, w, preferred_element_type=jnp.float32) + b
    y2 = jnp.dot(x2, w, preferred_element_type=jnp.float32) + b
    y1_ref[...] = jnp.maximum(y1, 0.0).astype(y1_ref.dtype)
    y2_ref[...] = jnp.maximum(y2, 0.0).astype(y2_ref.dtype)


def _dual_last_fc_kernel(x1_ref, x2_ref, e_ref, w_ref, b_ref,
                         fw1_ref, fw2_ref, fw3_ref, fb_ref, o_ref):
    # Fused: last linear+relu of both towers + concat-free fc epilogue.
    w = w_ref[...]
    b = b_ref[...]
    h1 = jnp.maximum(
        jnp.dot(x1_ref[...].astype(jnp.bfloat16), w,
                preferred_element_type=jnp.float32) + b, 0.0)
    h2 = jnp.maximum(
        jnp.dot(x2_ref[...].astype(jnp.bfloat16), w,
                preferred_element_type=jnp.float32) + b, 0.0)
    y = jnp.dot(h1.astype(jnp.bfloat16), fw1_ref[...],
                preferred_element_type=jnp.float32)
    y = y + jnp.dot(h2.astype(jnp.bfloat16), fw2_ref[...],
                    preferred_element_type=jnp.float32)
    y = y + jnp.dot(e_ref[...].astype(jnp.bfloat16), fw3_ref[...],
                    preferred_element_type=jnp.float32)
    o_ref[...] = (y + fb_ref[...]).astype(o_ref.dtype)


# ---------------------------------------------------------------------------
# pallas_call wrappers
# ---------------------------------------------------------------------------
def dual_linear_relu(x1, x2, w, b, tm):
    R, K = x1.shape
    _, N = w.shape
    assert R % tm == 0
    tn = _choose_tn(N)
    n_col = N // tn
    if n_col == 1:
        # Grid-constant weight/bias: single-buffer to reclaim VMEM.
        w_spec = pl.BlockSpec((K, tn), lambda i, j: (0, j),
                              pipeline_mode=pl.Buffered(1))
        b_spec = pl.BlockSpec((1, tn), lambda i, j: (0, j),
                              pipeline_mode=pl.Buffered(1))
    else:
        w_spec = pl.BlockSpec((K, tn), lambda i, j: (0, j))
        b_spec = pl.BlockSpec((1, tn), lambda i, j: (0, j))
    return pl.pallas_call(
        _dual_linear_relu_kernel,
        out_shape=(jax.ShapeDtypeStruct((R, N), jnp.bfloat16),
                   jax.ShapeDtypeStruct((R, N), jnp.bfloat16)),
        grid=(R // tm, n_col),
        in_specs=[
            pl.BlockSpec((tm, K), lambda i, j: (i, 0)),   # tower 1 rows
            pl.BlockSpec((tm, K), lambda i, j: (i, 0)),   # tower 2 rows
            w_spec,
            b_spec,
        ],
        out_specs=(pl.BlockSpec((tm, tn), lambda i, j: (i, j)),
                   pl.BlockSpec((tm, tn), lambda i, j: (i, j))),
        compiler_params=pltpu.CompilerParams(
            dimension_semantics=("parallel", "parallel"),
            vmem_limit_bytes=VMEM_LIMIT),
    )(x1, x2, w, b)


def dual_last_fc(x1, x2, extra, w, b, fw1, fw2, fw3, fb, tm):
    R, K = x1.shape
    _, U = w.shape
    E = extra.shape[1]
    NO = fw1.shape[1]          # padded fc output width (128)
    assert R % tm == 0

    def _resident(shape):
        return pl.BlockSpec(shape, lambda i: (0, 0),
                            pipeline_mode=pl.Buffered(1))

    return pl.pallas_call(
        _dual_last_fc_kernel,
        out_shape=jax.ShapeDtypeStruct((R, NO), jnp.float32),
        grid=(R // tm,),
        in_specs=[
            pl.BlockSpec((tm, K), lambda i: (i, 0)),      # tower 1 rows
            pl.BlockSpec((tm, K), lambda i: (i, 0)),      # tower 2 rows
            pl.BlockSpec((tm, E), lambda i: (i, 0)),      # extrafeat rows
            _resident((K, U)),                            # last layer W
            _resident((1, U)),                            # last layer b
            _resident((U, NO)),                           # fc W slice 1
            _resident((U, NO)),                           # fc W slice 2
            _resident((E, NO)),                           # fc W slice 3
            _resident((1, NO)),                           # fc bias
        ],
        out_specs=pl.BlockSpec((tm, NO), lambda i: (i, 0)),
        compiler_params=pltpu.CompilerParams(
            dimension_semantics=("parallel",),
            vmem_limit_bytes=VMEM_LIMIT),
    )(x1, x2, extra, w, b, fw1, fw2, fw3, fb)


# ---------------------------------------------------------------------------
# Parameters
# ---------------------------------------------------------------------------
def init_params(key, input_dim, extra_dims, units=1000, layers=1):
    """Deterministic synthetic parameters matching nn.Linear shapes.

    Weights are stored transposed: (in_features, out_features); biases flat.
    """
    def draw(k, shape, scale):
        k, sub = jax.random.split(k)
        return k, scale * jax.random.normal(sub, shape, dtype=jnp.float32)

    k = key
    params = {}
    s1 = float(input_dim) ** -0.5
    k, params["hidden_1_w"] = draw(k, (input_dim, units), s1)
    k, params["hidden_1_b"] = draw(k, (units,), s1)

    su = float(units) ** -0.5
    params["net"] = []
    for _ in range(layers - 1):
        k, w = draw(k, (units, units), su)
        k, b = draw(k, (units,), su)
        params["net"].append((w, b))

    sf = float(2 * units + extra_dims) ** -0.5
    k, params["fc_w"] = draw(k, (2 * units + extra_dims, 1), sf)
    k, params["fc_b"] = draw(k, (1,), sf)
    return params


def prepare_params(raw, input_dim, extra_dims, units):
    """Pad lane dims to multiples of 128, cast weights to bf16, split fc_w."""
    din_p = _round_up(input_dim, LANE)
    u_p = _round_up(units, LANE)
    e_p = _round_up(extra_dims, LANE)

    def wpad(w, rows, cols):
        return _pad2d(w, rows, cols).astype(jnp.bfloat16)

    def bpad(b, cols):
        return _pad2d(b.reshape(1, -1), 1, cols)          # bias stays f32

    return {
        "hidden_w": wpad(raw["hidden_1_w"], din_p, u_p),
        "hidden_b": bpad(raw["hidden_1_b"], u_p),
        "net": [(wpad(w, u_p, u_p), bpad(b, u_p)) for (w, b) in raw["net"]],
        # fc_w split for the concat-free fc; output padded to 128 lanes.
        "fc_w1": wpad(raw["fc_w"][:units], u_p, LANE),
        "fc_w2": wpad(raw["fc_w"][units:2 * units], u_p, LANE),
        "fc_w3": wpad(raw["fc_w"][2 * units:], e_p, LANE),
        "fc_b": bpad(raw["fc_b"], LANE),
    }


# ---------------------------------------------------------------------------
# ModelSiamese forward
# ---------------------------------------------------------------------------
def model_siamese_forward(prep, input1, input2, extrafeat):
    B = input1.shape[0]
    din_p = prep["hidden_w"].shape[0]
    e_p = prep["fc_w3"].shape[0]

    tm, bp = _choose_row_tiling(B)

    # Pad each tower's input separately (no HBM concat of the two towers).
    x1 = _pad2d(input1, bp, din_p)
    x2 = _pad2d(input2, bp, din_p)
    ep = _pad2d(extrafeat, bp, e_p)

    net = prep["net"]
    if not net:
        # layers == 1: hidden_1 fused directly with the fc epilogue.
        out = dual_last_fc(x1, x2, ep, prep["hidden_w"], prep["hidden_b"],
                           prep["fc_w1"], prep["fc_w2"], prep["fc_w3"],
                           prep["fc_b"], tm)
    else:
        h1, h2 = dual_linear_relu(x1, x2, prep["hidden_w"], prep["hidden_b"],
                                  tm)
        # TODO(synk): for layers >= 3, fuse this loop into one pallas_call
        # (layer grid axis + VMEM-resident ping-pong activations) to remove
        # the remaining inter-layer HBM round trips.
        for (w, b) in net[:-1]:
            h1, h2 = dual_linear_relu(h1, h2, w, b, tm)
        w_last, b_last = net[-1]
        out = dual_last_fc(h1, h2, ep, w_last, b_last,
                           prep["fc_w1"], prep["fc_w2"], prep["fc_w3"],
                           prep["fc_b"], tm)
    return out[:B, :1]                              # drop row/lane padding


# ---------------------------------------------------------------------------
# Pure-JAX f32 reference (unpadded params) for sanity check
# ---------------------------------------------------------------------------
def reference_forward(raw, input1, input2, extrafeat):
    def lin(x, w, b):
        return x @ w + b

    x1 = jax.nn.relu(lin(input1, raw["hidden_1_w"], raw["hidden_1_b"]))
    x2 = jax.nn.relu(lin(input2, raw["hidden_1_w"], raw["hidden_1_b"]))
    for (w, b) in raw["net"]:
        x1 = jax.nn.relu(lin(x1, w, b))
        x2 = jax.nn.relu(lin(x2, w, b))
    x = jnp.concatenate([x1, x2, extrafeat], axis=1)
    return lin(x, raw["fc_w"], raw["fc_b"])


if __name__ == "__main__":
    # Small, forward-consistent shapes.
    batch = 4
    input_dim = 32
    extra_dims = 8
    units = 128
    layers = 2

    key = jax.random.PRNGKey(0)
    kp, k1, k2, k3 = jax.random.split(key, 4)

    raw = init_params(kp, input_dim, extra_dims, units=units, layers=layers)
    prep = prepare_params(raw, input_dim, extra_dims, units)

    input1 = jax.random.normal(k1, (batch, input_dim), dtype=jnp.float32)
    input2 = jax.random.normal(k2, (batch, input_dim), dtype=jnp.float32)
    extrafeat = jax.random.normal(k3, (batch, extra_dims), dtype=jnp.float32)

    out = model_siamese_forward(prep, input1, input2, extrafeat)
    out = jax.block_until_ready(out)

    ref = reference_forward(raw, input1, input2, extrafeat)
    assert out.shape == (batch, 1), out.shape
    # bf16 MXU inputs (f32 accumulation) -> loosened tolerance vs f32 ref.
    assert jnp.allclose(out, ref, atol=5e-2, rtol=5e-2), (out, ref)

    print("KERNEL_OK")
</pallas_src>

<mosaic_0001>
module attributes {stable_mosaic.version = 11 : i64} {
  func.func @_dual_linear_relu_kernel(%arg0: i32, %arg1: i32, %arg2: memref<8x128xf32, #tpu.memory_space<vmem>>, %arg3: memref<8x128xf32, #tpu.memory_space<vmem>>, %arg4: memref<128x128xbf16, #tpu.memory_space<vmem>>, %arg5: memref<1x128xf32, #tpu.memory_space<vmem>>, %arg6: memref<8x128xbf16, #tpu.memory_space<vmem>>, %arg7: memref<8x128xbf16, #tpu.memory_space<vmem>>) attributes {dimension_semantics = [#tpu.dimension_semantics<parallel>, #tpu.dimension_semantics<parallel>], iteration_bounds = array<i64: 1, 1>, scalar_prefetch = 0 : i64, scratch_operands = 0 : i64, tpu.core_type = #tpu.core_type<tc>, window_params = [{transform_indices = @transform_0, window_bounds = array<i64: 8, 128>}, {transform_indices = @transform_1, window_bounds = array<i64: 8, 128>}, {pipeline_mode = #tpu.pipeline_mode<synchronous>, transform_indices = @transform_2, window_bounds = array<i64: 128, 128>}, {pipeline_mode = #tpu.pipeline_mode<synchronous>, transform_indices = @transform_3, window_bounds = array<i64: 1, 128>}, {transform_indices = @transform_4, window_bounds = array<i64: 8, 128>}, {transform_indices = @transform_5, window_bounds = array<i64: 8, 128>}]} {
    %c0 = arith.constant 0 : index
    %c0_0 = arith.constant 0 : index
    %0 = vector.load %arg4[%c0, %c0_0] : memref<128x128xbf16, #tpu.memory_space<vmem>>, vector<128x128xbf16>
    %c0_1 = arith.constant 0 : index
    %c0_2 = arith.constant 0 : index
    %1 = vector.load %arg5[%c0_1, %c0_2] : memref<1x128xf32, #tpu.memory_space<vmem>>, vector<1x128xf32>
    %c0_3 = arith.constant 0 : index
    %c0_4 = arith.constant 0 : index
    %2 = vector.load %arg2[%c0_3, %c0_4] : memref<8x128xf32, #tpu.memory_space<vmem>>, vector<8x128xf32>
    %3 = arith.truncf %2 : vector<8x128xf32> to vector<8x128xbf16>
    %c0_5 = arith.constant 0 : index
    %c0_6 = arith.constant 0 : index
    %4 = vector.load %arg3[%c0_5, %c0_6] : memref<8x128xf32, #tpu.memory_space<vmem>>, vector<8x128xf32>
    %5 = arith.truncf %4 : vector<8x128xf32> to vector<8x128xbf16>
    %cst = arith.constant dense<0.000000e+00> : vector<8x128xf32>
    %6 = tpu.matmul %3, %0, %cst {dimension_numbers = #tpu.dot_dimension_numbers<[1], [0], [0], [1], [0, 0, 1, 1], [], []>} : vector<8x128xbf16>, vector<128x128xbf16>, vector<8x128xf32> -> vector<8x128xf32>
    %7 = vector.broadcast %1 : vector<1x128xf32> to vector<8x128xf32>
    %8 = arith.addf %6, %7 : vector<8x128xf32>
    %cst_7 = arith.constant dense<0.000000e+00> : vector<8x128xf32>
    %9 = tpu.matmul %5, %0, %cst_7 {dimension_numbers = #tpu.dot_dimension_numbers<[1], [0], [0], [1], [0, 0, 1, 1], [], []>} : vector<8x128xbf16>, vector<128x128xbf16>, vector<8x128xf32> -> vector<8x128xf32>
    %10 = vector.broadcast %1 : vector<1x128xf32> to vector<8x128xf32>
    %11 = arith.addf %9, %10 : vector<8x128xf32>
    %cst_8 = arith.constant 0.000000e+00 : f32
    %12 = vector.broadcast %cst_8 : f32 to vector<8x128xf32>
    %13 = arith.maximumf %8, %12 : vector<8x128xf32>
    %14 = arith.truncf %13 : vector<8x128xf32> to vector<8x128xbf16>
    %c0_9 = arith.constant 0 : index
    %c0_10 = arith.constant 0 : index
    %15 = vector.load %arg6[%c0_9, %c0_10] : memref<8x128xbf16, #tpu.memory_space<vmem>>, vector<8x128xbf16>
    tpu.vector_store %arg6[%c0_9, %c0_10], %14 {strides = array<i32>} : memref<8x128xbf16, #tpu.memory_space<vmem>>, vector<8x128xbf16>,
    %cst_11 = arith.constant 0.000000e+00 : f32
    %16 = vector.broadcast %cst_11 : f32 to vector<8x128xf32>
    %17 = arith.maximumf %11, %16 : vector<8x128xf32>
    %18 = arith.truncf %17 : vector<8x128xf32> to vector<8x128xbf16>
    %c0_12 = arith.constant 0 : index
    %c0_13 = arith.constant 0 : index
    %19 = vector.load %arg7[%c0_12, %c0_13] : memref<8x128xbf16, #tpu.memory_space<vmem>>, vector<8x128xbf16>
    tpu.vector_store %arg7[%c0_12, %c0_13], %18 {strides = array<i32>} : memref<8x128xbf16, #tpu.memory_space<vmem>>, vector<8x128xbf16>,
    return
  }
  func.func @transform_0(%arg0: i32, %arg1: i32) -> (i32, i32) {
    %c0_i32 = arith.constant 0 : i32
    %c0_i32_0 = arith.constant 0 : i32
    return %arg0, %c0_i32 : i32, i32
  }
  func.func @transform_1(%arg0: i32, %arg1: i32) -> (i32, i32) {
    %c0_i32 = arith.constant 0 : i32
    %c0_i32_0 = arith.constant 0 : i32
    return %arg0, %c0_i32 : i32, i32
  }
  func.func @transform_2(%arg0: i32, %arg1: i32) -> (i32, i32) {
    %c0_i32 = arith.constant 0 : i32
    %c0_i32_0 = arith.constant 0 : i32
    return %c0_i32, %arg1 : i32, i32
  }
  func.func @transform_3(%arg0: i32, %arg1: i32) -> (i32, i32) {
    %c0_i32 = arith.constant 0 : i32
    %c0_i32_0 = arith.constant 0 : i32
    return %c0_i32, %arg1 : i32, i32
  }
  func.func @transform_4(%arg0: i32, %arg1: i32) -> (i32, i32) {
    %c0_i32 = arith.constant 0 : i32
    return %arg0, %arg1 : i32, i32
  }
  func.func @transform_5(%arg0: i32, %arg1: i32) -> (i32, i32) {
    %c0_i32 = arith.constant 0 : i32
    return %arg0, %arg1 : i32, i32
  }
}

</mosaic_0001>

<llo_original>
// kernel: tpu_custom_call.1
$region0: #{tpu_custom_call.1}
  #allocation0 [shape = 'u32[]', space=smem, size = 0x4, offset = 0x4, fixed_abs, tag = 'smem constant byte address 0x4 - core index']
  #allocation1 [shape = 'u32[144,128]{1,0:T(1,128)}', space=vmem, size = 0x12000, scoped, tag = 'internal scratch']
  %s0 = inlined_call_operand.hbm [shape: f32[8,128], index: 0, kind: input, shape index: {}]
  %s1 = inlined_call_operand.hbm [shape: f32[8,128], index: 1, kind: input, shape index: {}]
  %s2 = inlined_call_operand.hbm [shape: bf16[128,128], index: 2, kind: input, shape index: {}]
  %s3 = inlined_call_operand.vmem [shape: f32[1,128], index: 3, kind: input, shape index: {}]
  %s4 = inlined_call_operand.hbm [shape: bf16[8,128], index: 4, kind: output, shape index: {0}]
  %s5 = inlined_call_operand.hbm [shape: bf16[8,128], index: 5, kind: output, shape index: {1}]
  %6 = xla_tuple %s4, %s5
  %s7 = sld [smem:[#allocation0]]
  $region46: #{tpu_custom_call.1} parent=0
    _
  %s9 = ssub.s32 1, %s7
  %s10 = scalar_select 0, %s9, %s7
  $region1: #{tpu_custom_call.1} parent=0
    #allocation2 [shape = 'u8[4096]{0}', space=vmem, size = 0x1000, scoped, tag = 'input window, operand 0, single buffered']
    #allocation3 [shape = 's32[1]{0}', space=sflag, size = 0x4, scoped, tag = 'scoped memory for tpu_custom_call.1']
    #allocation4 [shape = 's32[1]{0}', space=sflag, size = 0x4, scoped, tag = 'scoped memory for tpu_custom_call.1']
    #allocation5 [shape = 'u8[4096]{0}', space=vmem, size = 0x1000, scoped, tag = 'input window, operand 1, single buffered']
    #allocation6 [shape = 's32[1]{0}', space=sflag, size = 0x4, scoped, tag = 'scoped memory for tpu_custom_call.1']
    #allocation7 [shape = 'u8[32768]{0}', space=vmem, size = 0x8000, scoped, tag = 'input window, operand 2, single buffered']
    #allocation8 [shape = 'u8[2048]{0}', space=vmem, size = 0x800, scoped, tag = 'output window, operand 0, single buffered']
    #allocation9 [shape = 'u8[2048]{0}', space=vmem, size = 0x800, scoped, tag = 'output window, operand 1, single buffered']
    #allocation10 [shape = 's32[1]{0}', space=sflag, size = 0x4, scoped, tag = 'scoped memory for tpu_custom_call.1']
    %11 = vsyncpa [#allocation3], 0
    %12 = vsyncpa [#allocation6], 0
    %13 = vsyncpa [#allocation4], 0
    %14 = vsyncpa [#allocation10], 0
    // Predicated region
    $region2: #{tpu_custom_call.1} parent=1 // pred_check
      _
    $region3: #{tpu_custom_call.1} parent=1 // pred_check_branch
      %16 = sbr.rel (0) target = $region5
    $region4: #{tpu_custom_call.1} parent=1 // pred_region
      %s18 = ssub.s32 128, 128
      %19 = vsyncadd [#allocation3], %s18
      %s21 = sshll.u32 [#allocation2], 4
      %s22 = int_to_ptr.vmem [resolvable:$true] %s21
      %24 = dma.hbm_to_vmem [thread:$0]  %s0, 128, %s22, [#allocation3]
    $region5: #{tpu_custom_call.1} parent=1 // pred_fallthru
      _
    // Predicated region
    $region6: #{tpu_custom_call.1} parent=1 // pred_check
      _
    $region7: #{tpu_custom_call.1} parent=1 // pred_check_branch
      %26 = sbr.rel (0) target = $region9
    $region8: #{tpu_custom_call.1} parent=1 // pred_region
      %s28 = ssub.s32 128, 128
      %29 = vsyncadd [#allocation6], %s28
      %s31 = sshll.u32 [#allocation5], 4
      %s32 = int_to_ptr.vmem [resolvable:$true] %s31
      %34 = dma.hbm_to_vmem [thread:$0]  %s1, 128, %s32, [#allocation6]
    $region9: #{tpu_custom_call.1} parent=1 // pred_fallthru
      _
    // Predicated region
    $region10: #{tpu_custom_call.1} parent=1 // pred_check
      _
    $region11: #{tpu_custom_call.1} parent=1 // pred_check_branch
      %36 = sbr.rel (0) target = $region13
    $region12: #{tpu_custom_call.1} parent=1 // pred_region
      %s38 = ssub.s32 1024, 1024
      %39 = vsyncadd [#allocation6], %s38
      %s40 = sshll.u32 [#allocation7], 4
      %s41 = int_to_ptr.vmem [resolvable:$true] %s40
      %46 = dma.hbm_to_vmem [thread:$0]  %s2, 1024, %s41, [#allocation6], 64, 64, 4
    $region13: #{tpu_custom_call.1} parent=1 // pred_fallthru
      _
    // Predicated region
    $region14: #{tpu_custom_call.1} parent=1 // pred_check
      _
    $region15: #{tpu_custom_call.1} parent=1 // pred_check_branch
      %48 = sbr.rel (0) target = $region17
    $region16: #{tpu_custom_call.1} parent=1 // pred_region
      _
    $region17: #{tpu_custom_call.1} parent=1 // pred_fallthru
      _
    // Predicated region
    $region18: #{tpu_custom_call.1} parent=1 // pred_check
      _
    $region19: #{tpu_custom_call.1} parent=1 // pred_check_branch
      %50 = sbr.rel (0) target = $region21
    $region20: #{tpu_custom_call.1} parent=1 // pred_region
      %51 = dma.done [#allocation3], 128
    $region21: #{tpu_custom_call.1} parent=1 // pred_fallthru
      _
    // Predicated region
    $region22: #{tpu_custom_call.1} parent=1 // pred_check
      _
    $region23: #{tpu_custom_call.1} parent=1 // pred_check_branch
      %53 = sbr.rel (0) target = $region25
    $region24: #{tpu_custom_call.1} parent=1 // pred_region
      %54 = dma.done [#allocation6], 128
    $region25: #{tpu_custom_call.1} parent=1 // pred_fallthru
      _
    // Predicated region
    $region26: #{tpu_custom_call.1} parent=1 // pred_check
      _
    $region27: #{tpu_custom_call.1} parent=1 // pred_check_branch
      %56 = sbr.rel (0) target = $region29
    $region28: #{tpu_custom_call.1} parent=1 // pred_region
      %57 = dma.done [#allocation6], 1024
    $region29: #{tpu_custom_call.1} parent=1 // pred_fallthru
      _
    %v59 = vld [vmem:[#allocation7] sm:$0xf]
    %v60 = vld [vmem:[#allocation7 + $0x4] sm:$0xf]
    %v61 = vld [vmem:[#allocation7 + $0x8] sm:$0xf]
    %v62 = vld [vmem:[#allocation7 + $0xc] sm:$0xf]
    %v63 = vld [vmem:[#allocation7 + $0x10] sm:$0xf]
    %v64 = vld [vmem:[#allocation7 + $0x14] sm:$0xf]
    %v65 = vld [vmem:[#allocation7 + $0x18] sm:$0xf]
    %v66 = vld [vmem:[#allocation7 + $0x1c] sm:$0xf]
    %v67 = vld [vmem:[#allocation7 + $0x20] sm:$0xf]
    %v68 = vld [vmem:[#allocation7 + $0x24] sm:$0xf]
    %v69 = vld [vmem:[#allocation7 + $0x28] sm:$0xf]
    %v70 = vld [vmem:[#allocation7 + $0x2c] sm:$0xf]
    %v71 = vld [vmem:[#allocation7 + $0x30] sm:$0xf]
    %v72 = vld [vmem:[#allocation7 + $0x34] sm:$0xf]
    %v73 = vld [vmem:[#allocation7 + $0x38] sm:$0xf]
    %v74 = vld [vmem:[#allocation7 + $0x3c] sm:$0xf]
    %v75 = vld [vmem:[%s3] sm:$0x1]
    %v76 = vld [vmem:[#allocation2] sm:$0xff]
    %v77 = vpack.c.bf16 %v76, %v76
    %v78 = vld [vmem:[#allocation5] sm:$0xff]
    %v79 = vpack.c.bf16 %v78, %v78
    %v81 = vlaneseq
    %v82 = vshrl.u32 %v81, 7
    %v83 = vsub.s32 0, %v82
    %v84 = vrot.slane %v75, %v83
    %v102 = vunpack.c.l.b16 %v59
    %v103 = vunpack.c.l.b16 %v60
    %v104 = vunpack.c.l.b16 %v61
    %v105 = vunpack.c.l.b16 %v62
    %v106 = vunpack.c.l.b16 %v63
    %v107 = vunpack.c.l.b16 %v64
    %v108 = vunpack.c.l.b16 %v65
    %v109 = vunpack.c.l.b16 %v66
    %v110 = vunpack.c.l.b16 %v67
    %v111 = vunpack.c.l.b16 %v68
    %v112 = vunpack.c.l.b16 %v69
    %v113 = vunpack.c.l.b16 %v70
    %v114 = vunpack.c.l.b16 %v71
    %v115 = vunpack.c.l.b16 %v72
    %v116 = vunpack.c.l.b16 %v73
    %v117 = vunpack.c.l.b16 %v74
    %v118 = vpack.c.b16 %v103, %v102
    %v119 = vpack.c.b16 %v105, %v104
    %v120 = vpack.c.b16 %v107, %v106
    %v121 = vpack.c.b16 %v109, %v108
    %v122 = vpack.c.b16 %v111, %v110
    %v123 = vpack.c.b16 %v113, %v112
    %v124 = vpack.c.b16 %v115, %v114
    %v125 = vpack.c.b16 %v117, %v116
    %134 = vmatprep.subr.bf16.mxu0 0
    %135 = vmatpush1.bf16.msra.mxu0 %v125
    %136 = vmatprep.subr.bf16.mxu0 0
    %137 = vmatpush1.bf16.msra.mxu0 %v124
    %138 = vmatprep.subr.bf16.mxu0 0
    %139 = vmatpush1.bf16.msra.mxu0 %v123
    %140 = vmatprep.subr.bf16.mxu0 0
    %141 = vmatpush1.bf16.msra.mxu0 %v122
    %142 = vmatprep.subr.bf16.mxu0 0
    %143 = vmatpush1.bf16.msra.mxu0 %v121
    %144 = vmatprep.subr.bf16.mxu0 0
    %145 = vmatpush1.bf16.msra.mxu0 %v120
    %146 = vmatprep.subr.bf16.mxu0 0
    %147 = vmatpush1.bf16.msra.mxu0 %v119
    %148 = vmatprep.subr.bf16.mxu0 0
    %149 = vmatpush1.bf16.msra.mxu0 %v118
    %150 = vmatprep.subr.bf16.mxu0 0
    %151 = vmatpush2.bf16.msra.mxu0 0
    %152 = vmatprep.subr.bf16.mxu0 0
    %153 = vmatpush2.bf16.msra.mxu0 0
    %154 = vmatprep.subr.bf16.mxu0 0
    %155 = vmatpush2.bf16.msra.mxu0 0
    %156 = vmatprep.subr.bf16.mxu0 0
    %157 = vmatpush2.bf16.msra.mxu0 0
    %158 = vmatprep.subr.bf16.mxu0 0
    %159 = vmatpush2.bf16.msra.mxu0 0
    %160 = vmatprep.subr.bf16.mxu0 0
    %161 = vmatpush2.bf16.msra.mxu0 0
    %162 = vmatprep.subr.bf16.mxu0 0
    %163 = vmatpush2.bf16.msra.mxu0 0
    %164 = vmatprep.subr.bf16.mxu0 0
    %165 = vmatpush2.bf16.msra.mxu0 0
    %166 = vmatprep.mubr.bf16.mxu0 0
    %167 = vmatmul.mubr.bf16.gmra.mxu0 %v77
    %v168 = vpop.f32.mrf.mxu0
    %v169 = vadd.f32 %v84, %v168
    %v170 = vpop.f32.mrf.mxu0
    %v171 = vpop.f32.mrf.mxu0
    %v172 = vpop.f32.mrf.mxu0
    %173 = vdwg.mxu0
    %174 = vmatprep.subr.bf16.mxu0 0
    %175 = vmatpush1.bf16.msra.mxu0 %v125
    %176 = vmatprep.subr.bf16.mxu0 0
    %177 = vmatpush1.bf16.msra.mxu0 %v124
    %178 = vmatprep.subr.bf16.mxu0 0
    %179 = vmatpush1.bf16.msra.mxu0 %v123
    %180 = vmatprep.subr.bf16.mxu0 0
    %181 = vmatpush1.bf16.msra.mxu0 %v122
    %182 = vmatprep.subr.bf16.mxu0 0
    %183 = vmatpush1.bf16.msra.mxu0 %v121
    %184 = vmatprep.subr.bf16.mxu0 0
    %185 = vmatpush1.bf16.msra.mxu0 %v120
    %186 = vmatprep.subr.bf16.mxu0 0
    %187 = vmatpush1.bf16.msra.mxu0 %v119
    %188 = vmatprep.subr.bf16.mxu0 0
    %189 = vmatpush1.bf16.msra.mxu0 %v118
    %190 = vmatprep.subr.bf16.mxu0 0
    %191 = vmatpush2.bf16.msra.mxu0 0
    %192 = vmatprep.subr.bf16.mxu0 0
    %193 = vmatpush2.bf16.msra.mxu0 0
    %194 = vmatprep.subr.bf16.mxu0 0
    %195 = vmatpush2.bf16.msra.mxu0 0
    %196 = vmatprep.subr.bf16.mxu0 0
    %197 = vmatpush2.bf16.msra.mxu0 0
    %198 = vmatprep.subr.bf16.mxu0 0
    %199 = vmatpush2.bf16.msra.mxu0 0
    %200 = vmatprep.subr.bf16.mxu0 0
    %201 = vmatpush2.bf16.msra.mxu0 0
    %202 = vmatprep.subr.bf16.mxu0 0
    %203 = vmatpush2.bf16.msra.mxu0 0
    %204 = vmatprep.subr.bf16.mxu0 0
    %205 = vmatpush2.bf16.msra.mxu0 0
    %206 = vmatprep.mubr.bf16.mxu0 0
    %207 = vmatmul.mubr.bf16.gmra.mxu0 %v79
    %v208 = vpop.f32.mrf.mxu0
    %v209 = vadd.f32 %v84, %v208
    %v210 = vpop.f32.mrf.mxu0
    %v211 = vpop.f32.mrf.mxu0
    %v212 = vpop.f32.mrf.mxu0
    %213 = vdwg.mxu0
    %v214 = vmax.f32 %v169, 0.0
    %v215 = vpack.c.bf16 %v214, %v214
    %216 = vst [vmem:[#allocation8] sm:$0xf] %v215
    %v217 = vmax.f32 %v209, 0.0
    %v218 = vpack.c.bf16 %v217, %v217
    %219 = vst [vmem:[#allocation9] sm:$0xf] %v218
    // Predicated region
    $region30: #{tpu_custom_call.1} parent=1 // pred_check
      _
    $region31: #{tpu_custom_call.1} parent=1 // pred_check_branch
      %221 = sbr.rel (0) target = $region33
    $region32: #{tpu_custom_call.1} parent=1 // pred_region
      %s223 = ssub.s32 64, 64
      %224 = vsyncadd [#allocation4], %s223
      %s226 = sshll.u32 [#allocation8], 4
      %s227 = int_to_ptr.vmem [resolvable:$true] %s226
      %229 = dma.vmem_to_hbm [thread:$0]  %s227, 64, %s4, [#allocation4]
    $region33: #{tpu_custom_call.1} parent=1 // pred_fallthru
      _
    // Predicated region
    $region34: #{tpu_custom_call.1} parent=1 // pred_check
      _
    $region35: #{tpu_custom_call.1} parent=1 // pred_check_branch
      %231 = sbr.rel (0) target = $region37
    $region36: #{tpu_custom_call.1} parent=1 // pred_region
      %s233 = ssub.s32 64, 64
      %234 = vsyncadd [#allocation10], %s233
      %s236 = sshll.u32 [#allocation9], 4
      %s237 = int_to_ptr.vmem [resolvable:$true] %s236
      %239 = dma.vmem_to_hbm [thread:$0]  %s237, 64, %s5, [#allocation10]
    $region37: #{tpu_custom_call.1} parent=1 // pred_fallthru
      _
    // Predicated region
    $region38: #{tpu_custom_call.1} parent=1 // pred_check
      _
    $region39: #{tpu_custom_call.1} parent=1 // pred_check_branch
      %241 = sbr.rel (0) target = $region41
    $region40: #{tpu_custom_call.1} parent=1 // pred_region
      %242 = dma.done [#allocation4], 64
    $region41: #{tpu_custom_call.1} parent=1 // pred_fallthru
      _
    // Predicated region
    $region42: #{tpu_custom_call.1} parent=1 // pred_check
      _
    $region43: #{tpu_custom_call.1} parent=1 // pred_check_branch
      %244 = sbr.rel (0) target = $region45
    $region44: #{tpu_custom_call.1} parent=1 // pred_region
      %245 = dma.done [#allocation10], 64
    $region45: #{tpu_custom_call.1} parent=1 // pred_fallthru
      _
    %246 = vsyncpa [#allocation3], 1
    %247 = vsyncpa [#allocation6], 1
    %248 = vsyncpa [#allocation4], 1
    %249 = vsyncpa [#allocation10], 1

</llo_original>
